<compile_context>
chip_gen: v7x
topology: tpu7x:2x2x1
jax: 0.10.0
libtpu: 0.0.40
codegen_flags: <defaults>
</compile_context>

<pallas_src>
import math

import jax
import jax.numpy as jnp
from jax.experimental import pallas as pl
from jax.experimental.pallas import tpu as pltpu


def affine_kernel(x_ref, w_ref, b_ref, o_ref):
    # One batch tile resident in VMEM; weights/bias stay resident across steps.
    o_ref[...] = (
        jnp.dot(x_ref[...], w_ref[...], preferred_element_type=jnp.float32)
        + b_ref[...]
    ).astype(o_ref.dtype)


def _round_up(v, m):
    return ((v + m - 1) // m) * m


def compose_affine(params):
    """Fold the 4 bias-affine layers into a single (W, b) pair (no activations)."""
    (w1, b1), (w2, b2), (w3, b3), (w4, b4) = params
    W = w1 @ w2 @ w3 @ w4
    b = ((b1 @ w2 + b2) @ w3 + b3) @ w4 + b4
    return W, b


def mlp_forward(x, params, tile_b=512):
    """Forward pass of the 4-layer MLP, computed as one fused affine map."""
    W, b = compose_affine(params)          # tiny (in, 2) / (1, 2) — done once, outside kernel
    B, in_dim = x.shape
    out_dim = W.shape[1]

    # Batch tile: multiple of 8 (f32 sublanes), capped at tile_b. Pad B up to a
    # multiple of the tile so the (8,128) block constraint is always satisfied.
    tb = min(tile_b, _round_up(B, 8))
    Bp = _round_up(B, tb)
    if Bp != B:
        x = jnp.pad(x, ((0, Bp - B), (0, 0)))

    grid = (Bp // tb,)

    out = pl.pallas_call(
        affine_kernel,
        out_shape=jax.ShapeDtypeStruct((Bp, out_dim), jnp.float32),
        grid=grid,
        in_specs=[
            pl.BlockSpec((tb, in_dim), lambda i: (i, 0)),       # batch tile of x
            pl.BlockSpec((in_dim, out_dim), lambda i: (0, 0)),  # composed W (resident)
            pl.BlockSpec((1, out_dim), lambda i: (0, 0)),       # composed bias (resident)
        ],
        out_specs=pl.BlockSpec((tb, out_dim), lambda i: (i, 0)),
        compiler_params=pltpu.CompilerParams(
            dimension_semantics=("parallel",),  # shard batch tiles across TCs (v7x)
        ),
    )(x, W, b)

    return out[:B]


def init_linear(key, in_features, out_features):
    # Matches PyTorch nn.Linear default init: U(-1/sqrt(fan_in), 1/sqrt(fan_in)).
    kw, kb = jax.random.split(key)
    bound = 1.0 / math.sqrt(in_features)
    w = jax.random.uniform(kw, (in_features, out_features), jnp.float32,
                           minval=-bound, maxval=bound)
    # Bias kept 2D (1, out) for TPU-friendly layout; broadcasts over batch.
    b = jax.random.uniform(kb, (1, out_features), jnp.float32,
                           minval=-bound, maxval=bound)
    return w, b


def reference_forward(x, params):
    ref = x
    for w, b in params:
        ref = ref @ w + b
    return ref


if __name__ == "__main__":
    key = jax.random.PRNGKey(0)
    k_x, k_x2, k1, k2, k3, k4 = jax.random.split(key, 6)

    input_neurons = 16
    batch = 8

    params = (
        init_linear(k1, input_neurons, 20),
        init_linear(k2, 20, 20),
        init_linear(k3, 20, 9),
        init_linear(k4, 9, 2),
    )

    # Main small-shape run.
    x = jax.random.normal(k_x, (batch, input_neurons), jnp.float32)
    out = mlp_forward(x, params)
    jax.block_until_ready(out)

    ref = reference_forward(x, params)
    assert out.shape == (batch, 2)
    assert jnp.allclose(out, ref, atol=1e-5, rtol=1e-5)

    # Secondary check: batch not a multiple of the tile -> exercises grid + padding path.
    x2 = jax.random.normal(k_x2, (1000, input_neurons), jnp.float32)
    out2 = mlp_forward(x2, params, tile_b=512)
    jax.block_until_ready(out2)
    ref2 = reference_forward(x2, params)
    assert out2.shape == (1000, 2)
    assert jnp.allclose(out2, ref2, atol=1e-5, rtol=1e-5)

    print("KERNEL_OK")
</pallas_src>

<mosaic_0001>
module attributes {stable_mosaic.version = 11 : i64} {
  func.func @affine_kernel(%arg0: i32, %arg1: memref<8x16xf32, #tpu.memory_space<vmem>>, %arg2: memref<16x2xf32, #tpu.memory_space<vmem>>, %arg3: memref<1x2xf32, #tpu.memory_space<vmem>>, %arg4: memref<8x2xf32, #tpu.memory_space<vmem>>) attributes {dimension_semantics = [#tpu.dimension_semantics<parallel>], iteration_bounds = array<i64: 1>, scalar_prefetch = 0 : i64, scratch_operands = 0 : i64, tpu.core_type = #tpu.core_type<tc>, window_params = [{transform_indices = @transform_0, window_bounds = array<i64: 8, 16>}, {pipeline_mode = #tpu.pipeline_mode<synchronous>, transform_indices = @transform_1, window_bounds = array<i64: 16, 2>}, {pipeline_mode = #tpu.pipeline_mode<synchronous>, transform_indices = @transform_2, window_bounds = array<i64: 1, 2>}, {transform_indices = @transform_3, window_bounds = array<i64: 8, 2>}]} {
    %c0 = arith.constant 0 : index
    %c0_0 = arith.constant 0 : index
    %0 = vector.load %arg1[%c0, %c0_0] : memref<8x16xf32, #tpu.memory_space<vmem>>, vector<8x16xf32>
    %c0_1 = arith.constant 0 : index
    %c0_2 = arith.constant 0 : index
    %1 = vector.load %arg2[%c0_1, %c0_2] : memref<16x2xf32, #tpu.memory_space<vmem>>, vector<16x2xf32>
    %cst = arith.constant dense<0.000000e+00> : vector<8x2xf32>
    %2 = tpu.matmul %0, %1, %cst {dimension_numbers = #tpu.dot_dimension_numbers<[1], [0], [0], [1], [0, 0, 1, 1], [], []>} : vector<8x16xf32>, vector<16x2xf32>, vector<8x2xf32> -> vector<8x2xf32>
    %c0_3 = arith.constant 0 : index
    %c0_4 = arith.constant 0 : index
    %3 = vector.load %arg3[%c0_3, %c0_4] : memref<1x2xf32, #tpu.memory_space<vmem>>, vector<1x2xf32>
    %4 = vector.broadcast %3 : vector<1x2xf32> to vector<8x2xf32>
    %5 = arith.addf %2, %4 : vector<8x2xf32>
    %c0_5 = arith.constant 0 : index
    %c0_6 = arith.constant 0 : index
    %6 = vector.load %arg4[%c0_5, %c0_6] : memref<8x2xf32, #tpu.memory_space<vmem>>, vector<8x2xf32>
    tpu.vector_store %arg4[%c0_5, %c0_6], %5 {strides = array<i32>} : memref<8x2xf32, #tpu.memory_space<vmem>>, vector<8x2xf32>,
    return
  }
  func.func @transform_0(%arg0: i32) -> (i32, i32) {
    %c0_i32 = arith.constant 0 : i32
    %c0_i32_0 = arith.constant 0 : i32
    return %arg0, %c0_i32 : i32, i32
  }
  func.func @transform_1(%arg0: i32) -> (i32, i32) {
    %c0_i32 = arith.constant 0 : i32
    %c0_i32_0 = arith.constant 0 : i32
    %c0_i32_1 = arith.constant 0 : i32
    return %c0_i32, %c0_i32_0 : i32, i32
  }
  func.func @transform_2(%arg0: i32) -> (i32, i32) {
    %c0_i32 = arith.constant 0 : i32
    %c0_i32_0 = arith.constant 0 : i32
    %c0_i32_1 = arith.constant 0 : i32
    return %c0_i32, %c0_i32_0 : i32, i32
  }
  func.func @transform_3(%arg0: i32) -> (i32, i32) {
    %c0_i32 = arith.constant 0 : i32
    %c0_i32_0 = arith.constant 0 : i32
    return %arg0, %c0_i32 : i32, i32
  }
}

</mosaic_0001>

<llo_original>
// kernel: tpu_custom_call.1
$region0: #{tpu_custom_call.1}
  #allocation0 [shape = 'u32[]', space=smem, size = 0x4, offset = 0x4, fixed_abs, tag = 'smem constant byte address 0x4 - core index']
  #allocation1 [shape = 'u32[144,128]{1,0:T(1,128)}', space=vmem, size = 0x12000, scoped, tag = 'internal scratch']
  %s0 = inlined_call_operand.vmem [shape: f32[8,16], index: 0, kind: input, shape index: {}]
  %s1 = inlined_call_operand.vmem [shape: f32[16,2], index: 1, kind: input, shape index: {}]
  %s2 = inlined_call_operand.vmem [shape: f32[1,2], index: 2, kind: input, shape index: {}]
  %s3 = inlined_call_operand.vmem [shape: f32[8,2], index: 3, kind: output, shape index: {}]
  %s4 = sld [smem:[#allocation0]]
  $region22: #{tpu_custom_call.1} parent=0
    _
  %s6 = ssub.s32 1, %s4
  %s7 = scalar_select 0, %s6, %s4
  // Predicated region
  $region2: #{tpu_custom_call.1} parent=0 // pred_check
    _
  $region3: #{tpu_custom_call.1} parent=0 // pred_check_branch
    %9 = sbr.rel (0) target = $region5
  $region4: #{tpu_custom_call.1} parent=0 // pred_region
    _
  $region5: #{tpu_custom_call.1} parent=0 // pred_fallthru
    _
  // Predicated region
  $region6: #{tpu_custom_call.1} parent=0 // pred_check
    _
  $region7: #{tpu_custom_call.1} parent=0 // pred_check_branch
    %11 = sbr.rel (0) target = $region9
  $region8: #{tpu_custom_call.1} parent=0 // pred_region
    _
  $region9: #{tpu_custom_call.1} parent=0 // pred_fallthru
    _
  // Predicated region
  $region10: #{tpu_custom_call.1} parent=0 // pred_check
    _
  $region11: #{tpu_custom_call.1} parent=0 // pred_check_branch
    %13 = sbr.rel (0) target = $region13
  $region12: #{tpu_custom_call.1} parent=0 // pred_region
    _
  $region13: #{tpu_custom_call.1} parent=0 // pred_fallthru
    _
  %v14 = vld [vmem:[%s0] sm:$0xff]
  %v15 = vld [vmem:[%s1] sm:$0xff]
  %v16 = vld [vmem:[%s1 + $0x8] sm:$0xff]
  %v17 = vld [vmem:[%s2] sm:$0x1]
  %v19 = vlaneseq
  %v20 = vshrl.u32 %v19, 7
  %v21 = vsub.s32 0, %v20
  %v22 = vrot.slane %v17, %v21
  %vm24 = vcmask 130048
  %v26 = vsel %vm24, %v14, 0
  %28 = vmatprep.subr.mxu0 0.0
  %29 = vmatpush1.msra.mxu0 %v15
  %30 = vmatprep.subr.mxu0 0.0
  %31 = vmatpush1.msra.mxu0 %v16
  %32 = vmatprep.subr.mxu0 0.0
  %33 = vmatpush1.msra.mxu0 0.0
  %34 = vmatprep.subr.mxu0 0.0
  %35 = vmatpush1.msra.mxu0 0.0
  %36 = vmatprep.subr.mxu0 0.0
  %37 = vmatpush1.msra.mxu0 0.0
  %38 = vmatprep.subr.mxu0 0.0
  %39 = vmatpush1.msra.mxu0 0.0
  %40 = vmatprep.subr.mxu0 0.0
  %41 = vmatpush1.msra.mxu0 0.0
  %42 = vmatprep.subr.mxu0 0.0
  %43 = vmatpush1.msra.mxu0 0.0
  %44 = vmatprep.subr.mxu0 0.0
  %45 = vmatpush1.msra.mxu0 0.0
  %46 = vmatprep.subr.mxu0 0.0
  %47 = vmatpush1.msra.mxu0 0.0
  %48 = vmatprep.subr.mxu0 0.0
  %49 = vmatpush1.msra.mxu0 0.0
  %50 = vmatprep.subr.mxu0 0.0
  %51 = vmatpush1.msra.mxu0 0.0
  %52 = vmatprep.subr.mxu0 0.0
  %53 = vmatpush1.msra.mxu0 0.0
  %54 = vmatprep.subr.mxu0 0.0
  %55 = vmatpush1.msra.mxu0 0.0
  %56 = vmatprep.subr.mxu0 0.0
  %57 = vmatpush1.msra.mxu0 0.0
  %58 = vmatprep.subr.mxu0 0.0
  %59 = vmatpush1.msra.mxu0 0.0
  %60 = vmatprep.subr.mxu0 0.0
  %61 = vmatpush1.msra.mxu0 0.0
  %62 = vmatprep.subr.mxu0 0.0
  %63 = vmatpush1.msra.mxu0 0.0
  %64 = vmatprep.subr.mxu0 0.0
  %65 = vmatpush1.msra.mxu0 0.0
  %66 = vmatprep.subr.mxu0 0.0
  %67 = vmatpush1.msra.mxu0 0.0
  %68 = vmatprep.subr.mxu0 0.0
  %69 = vmatpush1.msra.mxu0 0.0
  %70 = vmatprep.subr.mxu0 0.0
  %71 = vmatpush1.msra.mxu0 0.0
  %72 = vmatprep.subr.mxu0 0.0
  %73 = vmatpush1.msra.mxu0 0.0
  %74 = vmatprep.subr.mxu0 0.0
  %75 = vmatpush1.msra.mxu0 0.0
  %76 = vmatprep.subr.mxu0 0.0
  %77 = vmatpush1.msra.mxu0 0.0
  %78 = vmatprep.subr.mxu0 0.0
  %79 = vmatpush1.msra.mxu0 0.0
  %80 = vmatprep.subr.mxu0 0.0
  %81 = vmatpush1.msra.mxu0 0.0
  %82 = vmatprep.subr.mxu0 0.0
  %83 = vmatpush1.msra.mxu0 0.0
  %84 = vmatprep.subr.mxu0 0.0
  %85 = vmatpush1.msra.mxu0 0.0
  %86 = vmatprep.subr.mxu0 0.0
  %87 = vmatpush1.msra.mxu0 0.0
  %88 = vmatprep.subr.mxu0 0.0
  %89 = vmatpush1.msra.mxu0 0.0
  %90 = vmatprep.subr.mxu0 0.0
  %91 = vmatpush1.msra.mxu0 0.0
  %92 = vmatprep.mubr.f32.mxu0 0.0
  %93 = vmatmul.mubr.f32.gmra.mrb[0].mxu0 %v26
  %v94 = vpop.f32.mrb[0].mxu0
  %v95 = vadd.f32 %v22, %v94
  %v96 = vpop.f32.mrb[0].mxu0
  %97 = vdwg.mxu0
  %vm98 = vcmask 15360
  %99 = vst.msk [vmem:[%s3] sm:$0xff] %vm98, %v95
  // Predicated region
  $region14: #{tpu_custom_call.1} parent=0 // pred_check
    _
  $region15: #{tpu_custom_call.1} parent=0 // pred_check_branch
    %101 = sbr.rel (0) target = $region17
  $region16: #{tpu_custom_call.1} parent=0 // pred_region
    _
  $region17: #{tpu_custom_call.1} parent=0 // pred_fallthru
    _
  // Predicated region
  $region18: #{tpu_custom_call.1} parent=0 // pred_check
    _
  $region19: #{tpu_custom_call.1} parent=0 // pred_check_branch
    %103 = sbr.rel (0) target = $region21
  $region20: #{tpu_custom_call.1} parent=0 // pred_region
    _
  $region21: #{tpu_custom_call.1} parent=0 // pred_fallthru
    _

</llo_original>
